<compile_context>
chip_gen: v5e
topology: v5e:2x2
jax: 0.10.0
libtpu: 0.0.40
codegen_flags: <defaults>
</compile_context>

<pallas_src>
import math

import jax
import jax.numpy as jnp
from jax.experimental import pallas as pl
from jax.experimental.pallas import tpu as pltpu


def _round_up(n, m):
    return ((n + m - 1) // m) * m


def _pad2d(a, rows, cols):
    pr, pc = rows - a.shape[0], cols - a.shape[1]
    if pr == 0 and pc == 0:
        return a
    return jnp.pad(a, ((0, pr), (0, pc)))


def _make_mlp_kernel(n_layers, compute_dtype):
    """Fused MLP kernel body for `n_layers` Linear layers.

    Ref order: x, W_0..W_{L-1}, b_0..b_{L-1}, out.
    ReLU after every layer except the last (matches DeepQN.forward).
    Layer 0 runs in f32 (K = in_dim is tiny); layers 1.. use `compute_dtype`
    (bf16) operands with f32 MXU accumulation. Bias-add / ReLU stay in f32.
    """

    def kernel(*refs):
        x_ref = refs[0]
        w_refs = refs[1:1 + n_layers]
        b_refs = refs[1 + n_layers:1 + 2 * n_layers]
        o_ref = refs[-1]

        # Layer 0: f32 matmul with K = in_dim (compiler pads the MXU operand).
        h = jnp.dot(x_ref[...].astype(jnp.float32), w_refs[0][...],
                    preferred_element_type=jnp.float32)
        h = h + b_refs[0][...]
        if n_layers > 1:
            h = jnp.maximum(h, 0.0)

        # Layers 1..L-1: bf16 operands, f32 accumulation, f32 epilogue.
        for i in range(1, n_layers):
            acc = jnp.dot(h.astype(compute_dtype), w_refs[i][...],
                          preferred_element_type=jnp.float32)
            acc = acc + b_refs[i][...]
            if i < n_layers - 1:
                acc = jnp.maximum(acc, 0.0)
            h = acc

        o_ref[...] = h.astype(o_ref.dtype)

    return kernel


def prepare_deep_qn_params(weights, biases, *, compute_dtype=jnp.bfloat16, lane=128):
    """One-time (init-time) packing of DeepQN parameters for the Pallas kernel.

    weights[i]: (in_i, out_i) f32 (pre-transposed vs torch's (out, in) layout)
    biases[i]:  (out_i,) or (1, out_i) f32

    Hidden feature dims are zero-padded to multiples of `lane`; the input and
    output dims stay unpadded. Layer 0's weight stays f32 (precision); later
    weights are cast to bf16. Zero padding keeps the math exact.
    """
    n_layers = len(weights)
    dims = [weights[0].shape[0]] + [w.shape[1] for w in weights]
    pdims = [dims[0]] + [_round_up(d, lane) for d in dims[1:-1]] + [dims[-1]]

    w_p, b_p = [], []
    for i in range(n_layers):
        w = _pad2d(jnp.asarray(weights[i], jnp.float32), pdims[i], pdims[i + 1])
        b = _pad2d(jnp.asarray(biases[i], jnp.float32).reshape(1, -1), 1, pdims[i + 1])
        if i > 0:
            w = w.astype(compute_dtype)
        w_p.append(w)
        b_p.append(b)
    return tuple(w_p), tuple(b_p)


def deep_qn_forward(states, weights_packed, biases_packed, *, block_batch=512,
                    compute_dtype=jnp.bfloat16):
    """Fused DeepQN forward: one Pallas kernel, batch-tiled over a 1-D grid.

    states: (B, in_dim) f32, passed raw (no wrapper pad/cast/slice ops).
    weights_packed / biases_packed: output of prepare_deep_qn_params().
    Returns (B, out_dim) f32 Q-values.
    """
    n_layers = len(weights_packed)
    batch, in_dim = states.shape
    out_dim = weights_packed[-1].shape[1]

    # Batch tile: single grid step for small batches (per-step overhead
    # dominates this tiny MLP); ~512-row tiles for large batches, which also
    # gives >= 2 "parallel" grid steps so both v7x TensorCores are engaged.
    if batch <= 1024:
        tb = _round_up(batch, 8)
    else:
        tb = _round_up(min(block_batch, 1024), 8)
    grid = (pl.cdiv(batch, tb),)
    # TODO(synk): if tb is pushed past ~512, bound the (tb, 128) f32 activation
    # live range with an in-kernel row sub-tile loop to avoid VMEM spills.

    in_specs = (
        # Activation tile streams over the batch grid (double-buffered by Pallas).
        [pl.BlockSpec((tb, in_dim), lambda i: (i, 0))]
        # Weights / biases: same block every step -> DMA'd once, VMEM-resident.
        + [pl.BlockSpec(w.shape, lambda i: (0, 0)) for w in weights_packed]
        + [pl.BlockSpec(b.shape, lambda i: (0, 0)) for b in biases_packed]
    )
    out_specs = pl.BlockSpec((tb, out_dim), lambda i: (i, 0))

    return pl.pallas_call(
        _make_mlp_kernel(n_layers, compute_dtype),
        out_shape=jax.ShapeDtypeStruct((batch, out_dim), jnp.float32),
        grid=grid,
        in_specs=in_specs,
        out_specs=out_specs,
        compiler_params=pltpu.CompilerParams(
            dimension_semantics=("parallel",)),
    )(states, *weights_packed, *biases_packed)


def init_deep_qn_params(key, input_shape, output_shape, hidden_layer_dims):
    """Deterministic init mirroring torch.nn.Linear's U(-1/sqrt(fan_in), 1/sqrt(fan_in))."""
    dims = [input_shape[0]] + list(hidden_layer_dims) + [output_shape[0]]
    weights, biases = [], []
    for i in range(len(dims) - 1):
        fan_in, fan_out = dims[i], dims[i + 1]
        key, kw, kb = jax.random.split(key, 3)
        bound = 1.0 / math.sqrt(fan_in)
        # stored as (in, out) — already "transposed" relative to torch's (out, in)
        w = jax.random.uniform(kw, (fan_in, fan_out), jnp.float32, -bound, bound)
        b = jax.random.uniform(kb, (1, fan_out), jnp.float32, -bound, bound)
        weights.append(w)
        biases.append(b)
    return weights, biases


def deep_qn_reference(states, weights, biases, compute_dtype=jnp.bfloat16):
    """Pure-JAX reference mirroring the kernel's math (layer 0 f32, rest bf16 + f32 acc)."""
    h = states.astype(jnp.float32)
    for i, (w, b) in enumerate(zip(weights, biases)):
        w = jnp.asarray(w, jnp.float32)
        if i > 0:
            h = h.astype(compute_dtype).astype(jnp.float32)
            w = w.astype(compute_dtype).astype(jnp.float32)
        h = jnp.dot(h, w, precision=jax.lax.Precision.HIGHEST) \
            + jnp.asarray(b, jnp.float32).reshape(1, -1)
        if i < len(weights) - 1:
            h = jnp.maximum(h, 0.0)
    return h


if __name__ == "__main__":
    # DeepQN(input_shape=(4,), output_shape=(2,), hidden_layer_dims=[32, 32])
    input_shape = (4,)
    output_shape = (2,)
    hidden_layer_dims = [32, 32]

    key = jax.random.PRNGKey(0)
    weights, biases = init_deep_qn_params(key, input_shape, output_shape,
                                          hidden_layer_dims)
    # One-time packing: pad hidden dims to 128 lanes, cast layers 1.. to bf16.
    w_p, b_p = prepare_deep_qn_params(weights, biases)

    fwd = jax.jit(lambda s: deep_qn_forward(s, w_p, b_p))

    # batch=256: single-step grid; batch=37: ragged (masked) last rows;
    # batch=1300: multi-step streaming grid with a ragged final block.
    for batch in (256, 37, 1300):
        kx = jax.random.fold_in(jax.random.PRNGKey(0), batch)
        states = jax.random.normal(kx, (batch, input_shape[0]), jnp.float32)

        out = jax.block_until_ready(fwd(states))
        ref = deep_qn_reference(states, weights, biases)

        assert out.shape == (batch, output_shape[0])
        assert jnp.allclose(out, ref, atol=2e-3, rtol=2e-3), \
            f"mismatch vs JAX reference at batch={batch}"

    print("KERNEL_OK")
</pallas_src>

<mosaic_0001>
module attributes {stable_mosaic.version = 11 : i64} {
  func.func @kernel(%arg0: i32, %arg1: memref<256x4xf32, #tpu.memory_space<vmem>>, %arg2: memref<4x128xf32, #tpu.memory_space<vmem>>, %arg3: memref<128x128xbf16, #tpu.memory_space<vmem>>, %arg4: memref<128x2xbf16, #tpu.memory_space<vmem>>, %arg5: memref<1x128xf32, #tpu.memory_space<vmem>>, %arg6: memref<1x128xf32, #tpu.memory_space<vmem>>, %arg7: memref<1x2xf32, #tpu.memory_space<vmem>>, %arg8: memref<256x2xf32, #tpu.memory_space<vmem>>) attributes {dimension_semantics = [#tpu.dimension_semantics<parallel>], iteration_bounds = array<i64: 1>, scalar_prefetch = 0 : i64, scratch_operands = 0 : i64, tpu.core_type = #tpu.core_type<tc>, window_params = [{transform_indices = @transform_0, window_bounds = array<i64: 256, 4>}, {pipeline_mode = #tpu.pipeline_mode<synchronous>, transform_indices = @transform_1, window_bounds = array<i64: 4, 128>}, {pipeline_mode = #tpu.pipeline_mode<synchronous>, transform_indices = @transform_2, window_bounds = array<i64: 128, 128>}, {pipeline_mode = #tpu.pipeline_mode<synchronous>, transform_indices = @transform_3, window_bounds = array<i64: 128, 2>}, {pipeline_mode = #tpu.pipeline_mode<synchronous>, transform_indices = @transform_4, window_bounds = array<i64: 1, 128>}, {pipeline_mode = #tpu.pipeline_mode<synchronous>, transform_indices = @transform_5, window_bounds = array<i64: 1, 128>}, {pipeline_mode = #tpu.pipeline_mode<synchronous>, transform_indices = @transform_6, window_bounds = array<i64: 1, 2>}, {transform_indices = @transform_7, window_bounds = array<i64: 256, 2>}]} {
    %c0 = arith.constant 0 : index
    %c0_0 = arith.constant 0 : index
    %0 = vector.load %arg1[%c0, %c0_0] : memref<256x4xf32, #tpu.memory_space<vmem>>, vector<256x4xf32>
    %c0_1 = arith.constant 0 : index
    %c0_2 = arith.constant 0 : index
    %1 = vector.load %arg2[%c0_1, %c0_2] : memref<4x128xf32, #tpu.memory_space<vmem>>, vector<4x128xf32>
    %cst = arith.constant dense<0.000000e+00> : vector<256x128xf32>
    %2 = tpu.matmul %0, %1, %cst {dimension_numbers = #tpu.dot_dimension_numbers<[1], [0], [0], [1], [0, 0, 1, 1], [], []>} : vector<256x4xf32>, vector<4x128xf32>, vector<256x128xf32> -> vector<256x128xf32>
    %c0_3 = arith.constant 0 : index
    %c0_4 = arith.constant 0 : index
    %3 = vector.load %arg5[%c0_3, %c0_4] : memref<1x128xf32, #tpu.memory_space<vmem>>, vector<1x128xf32>
    %4 = vector.broadcast %3 : vector<1x128xf32> to vector<256x128xf32>
    %5 = arith.addf %2, %4 : vector<256x128xf32>
    %cst_5 = arith.constant 0.000000e+00 : f32
    %6 = vector.broadcast %cst_5 : f32 to vector<256x128xf32>
    %7 = arith.maximumf %5, %6 : vector<256x128xf32>
    %8 = arith.truncf %7 : vector<256x128xf32> to vector<256x128xbf16>
    %c0_6 = arith.constant 0 : index
    %c0_7 = arith.constant 0 : index
    %9 = vector.load %arg3[%c0_6, %c0_7] : memref<128x128xbf16, #tpu.memory_space<vmem>>, vector<128x128xbf16>
    %cst_8 = arith.constant dense<0.000000e+00> : vector<256x128xf32>
    %10 = tpu.matmul %8, %9, %cst_8 {dimension_numbers = #tpu.dot_dimension_numbers<[1], [0], [0], [1], [0, 0, 1, 1], [], []>} : vector<256x128xbf16>, vector<128x128xbf16>, vector<256x128xf32> -> vector<256x128xf32>
    %c0_9 = arith.constant 0 : index
    %c0_10 = arith.constant 0 : index
    %11 = vector.load %arg6[%c0_9, %c0_10] : memref<1x128xf32, #tpu.memory_space<vmem>>, vector<1x128xf32>
    %12 = vector.broadcast %11 : vector<1x128xf32> to vector<256x128xf32>
    %13 = arith.addf %10, %12 : vector<256x128xf32>
    %cst_11 = arith.constant 0.000000e+00 : f32
    %14 = vector.broadcast %cst_11 : f32 to vector<256x128xf32>
    %15 = arith.maximumf %13, %14 : vector<256x128xf32>
    %16 = arith.truncf %15 : vector<256x128xf32> to vector<256x128xbf16>
    %c0_12 = arith.constant 0 : index
    %c0_13 = arith.constant 0 : index
    %17 = vector.load %arg4[%c0_12, %c0_13] : memref<128x2xbf16, #tpu.memory_space<vmem>>, vector<128x2xbf16>
    %cst_14 = arith.constant dense<0.000000e+00> : vector<256x2xf32>
    %18 = tpu.matmul %16, %17, %cst_14 {dimension_numbers = #tpu.dot_dimension_numbers<[1], [0], [0], [1], [0, 0, 1, 1], [], []>} : vector<256x128xbf16>, vector<128x2xbf16>, vector<256x2xf32> -> vector<256x2xf32>
    %c0_15 = arith.constant 0 : index
    %c0_16 = arith.constant 0 : index
    %19 = vector.load %arg7[%c0_15, %c0_16] : memref<1x2xf32, #tpu.memory_space<vmem>>, vector<1x2xf32>
    %20 = vector.broadcast %19 : vector<1x2xf32> to vector<256x2xf32>
    %21 = arith.addf %18, %20 : vector<256x2xf32>
    %c0_17 = arith.constant 0 : index
    %c0_18 = arith.constant 0 : index
    %22 = vector.load %arg8[%c0_17, %c0_18] : memref<256x2xf32, #tpu.memory_space<vmem>>, vector<256x2xf32>
    tpu.vector_store %arg8[%c0_17, %c0_18], %21 {strides = array<i32>} : memref<256x2xf32, #tpu.memory_space<vmem>>, vector<256x2xf32>,
    return
  }
  func.func @transform_0(%arg0: i32) -> (i32, i32) {
    %c0_i32 = arith.constant 0 : i32
    %c0_i32_0 = arith.constant 0 : i32
    return %arg0, %c0_i32 : i32, i32
  }
  func.func @transform_1(%arg0: i32) -> (i32, i32) {
    %c0_i32 = arith.constant 0 : i32
    %c0_i32_0 = arith.constant 0 : i32
    %c0_i32_1 = arith.constant 0 : i32
    return %c0_i32, %c0_i32_0 : i32, i32
  }
  func.func @transform_2(%arg0: i32) -> (i32, i32) {
    %c0_i32 = arith.constant 0 : i32
    %c0_i32_0 = arith.constant 0 : i32
    %c0_i32_1 = arith.constant 0 : i32
    return %c0_i32, %c0_i32_0 : i32, i32
  }
  func.func @transform_3(%arg0: i32) -> (i32, i32) {
    %c0_i32 = arith.constant 0 : i32
    %c0_i32_0 = arith.constant 0 : i32
    %c0_i32_1 = arith.constant 0 : i32
    return %c0_i32, %c0_i32_0 : i32, i32
  }
  func.func @transform_4(%arg0: i32) -> (i32, i32) {
    %c0_i32 = arith.constant 0 : i32
    %c0_i32_0 = arith.constant 0 : i32
    %c0_i32_1 = arith.constant 0 : i32
    return %c0_i32, %c0_i32_0 : i32, i32
  }
  func.func @transform_5(%arg0: i32) -> (i32, i32) {
    %c0_i32 = arith.constant 0 : i32
    %c0_i32_0 = arith.constant 0 : i32
    %c0_i32_1 = arith.constant 0 : i32
    return %c0_i32, %c0_i32_0 : i32, i32
  }
  func.func @transform_6(%arg0: i32) -> (i32, i32) {
    %c0_i32 = arith.constant 0 : i32
    %c0_i32_0 = arith.constant 0 : i32
    %c0_i32_1 = arith.constant 0 : i32
    return %c0_i32, %c0_i32_0 : i32, i32
  }
  func.func @transform_7(%arg0: i32) -> (i32, i32) {
    %c0_i32 = arith.constant 0 : i32
    %c0_i32_0 = arith.constant 0 : i32
    return %arg0, %c0_i32 : i32, i32
  }
}

</mosaic_0001>

<llo_original>
// kernel: _lambda_.1
$region0: #{_lambda_.1}
  #allocation0 [shape = 'u32[]', space=smem, size = 0x4, offset = 0x4, fixed_abs, tag = 'smem constant byte address 0x4 - core index']
  #allocation1 [shape = 'u32[72,128]{1,0:T(1,128)}', space=vmem, size = 0x9000, scoped, tag = 'internal scratch']
  %s0 = inlined_call_operand.vmem [shape: f32[256,4], index: 0, kind: input, shape index: {}]
  %s1 = inlined_call_operand.vmem [shape: f32[4,128], index: 1, kind: input, shape index: {}]
  %s2 = inlined_call_operand.vmem [shape: bf16[128,128], index: 2, kind: input, shape index: {}]
  %s3 = inlined_call_operand.vmem [shape: bf16[128,2], index: 3, kind: input, shape index: {}]
  %s4 = inlined_call_operand.vmem [shape: f32[1,128], index: 4, kind: input, shape index: {}]
  %s5 = inlined_call_operand.vmem [shape: f32[1,128], index: 5, kind: input, shape index: {}]
  %s6 = inlined_call_operand.vmem [shape: f32[1,2], index: 6, kind: input, shape index: {}]
  %s7 = inlined_call_operand.vmem [shape: f32[256,2], index: 7, kind: output, shape index: {}]
  %s8 = sld [smem:[#allocation0]]
  $region38: #{_lambda_.1} parent=0
    _
  %s10 = ssub.s32 1, %s8
  %s11 = scalar_select 0, %s10, %s8
  // Predicated region
  $region2: #{_lambda_.1} parent=0 // pred_check
    _
  $region3: #{_lambda_.1} parent=0 // pred_check_branch
    %13 = sbr.rel (0) target = $region5
  $region4: #{_lambda_.1} parent=0 // pred_region
    _
  $region5: #{_lambda_.1} parent=0 // pred_fallthru
    _
  // Predicated region
  $region6: #{_lambda_.1} parent=0 // pred_check
    _
  $region7: #{_lambda_.1} parent=0 // pred_check_branch
    %15 = sbr.rel (0) target = $region9
  $region8: #{_lambda_.1} parent=0 // pred_region
    _
  $region9: #{_lambda_.1} parent=0 // pred_fallthru
    _
  // Predicated region
  $region10: #{_lambda_.1} parent=0 // pred_check
    _
  $region11: #{_lambda_.1} parent=0 // pred_check_branch
    %17 = sbr.rel (0) target = $region13
  $region12: #{_lambda_.1} parent=0 // pred_region
    _
  $region13: #{_lambda_.1} parent=0 // pred_fallthru
    _
  // Predicated region
  $region14: #{_lambda_.1} parent=0 // pred_check
    _
  $region15: #{_lambda_.1} parent=0 // pred_check_branch
    %19 = sbr.rel (0) target = $region17
  $region16: #{_lambda_.1} parent=0 // pred_region
    _
  $region17: #{_lambda_.1} parent=0 // pred_fallthru
    _
  // Predicated region
  $region18: #{_lambda_.1} parent=0 // pred_check
    _
  $region19: #{_lambda_.1} parent=0 // pred_check_branch
    %21 = sbr.rel (0) target = $region21
  $region20: #{_lambda_.1} parent=0 // pred_region
    _
  $region21: #{_lambda_.1} parent=0 // pred_fallthru
    _
  // Predicated region
  $region22: #{_lambda_.1} parent=0 // pred_check
    _
  $region23: #{_lambda_.1} parent=0 // pred_check_branch
    %23 = sbr.rel (0) target = $region25
  $region24: #{_lambda_.1} parent=0 // pred_region
    _
  $region25: #{_lambda_.1} parent=0 // pred_fallthru
    _
  // Predicated region
  $region26: #{_lambda_.1} parent=0 // pred_check
    _
  $region27: #{_lambda_.1} parent=0 // pred_check_branch
    %25 = sbr.rel (0) target = $region29
  $region28: #{_lambda_.1} parent=0 // pred_region
    _
  $region29: #{_lambda_.1} parent=0 // pred_fallthru
    _
  %v26 = vld [vmem:[%s0] sm:$0xff]
  %v27 = vld [vmem:[%s0 + $0x8] sm:$0xff]
  %v28 = vld [vmem:[%s0 + $0x10] sm:$0xff]
  %v29 = vld [vmem:[%s0 + $0x18] sm:$0xff]
  %v30 = vld [vmem:[%s0 + $0x20] sm:$0xff]
  %v31 = vld [vmem:[%s0 + $0x28] sm:$0xff]
  %v32 = vld [vmem:[%s0 + $0x30] sm:$0xff]
  %v33 = vld [vmem:[%s0 + $0x38] sm:$0xff]
  %v34 = vld [vmem:[%s0 + $0x40] sm:$0xff]
  %v35 = vld [vmem:[%s0 + $0x48] sm:$0xff]
  %v36 = vld [vmem:[%s0 + $0x50] sm:$0xff]
  %v37 = vld [vmem:[%s0 + $0x58] sm:$0xff]
  %v38 = vld [vmem:[%s0 + $0x60] sm:$0xff]
  %v39 = vld [vmem:[%s0 + $0x68] sm:$0xff]
  %v40 = vld [vmem:[%s0 + $0x70] sm:$0xff]
  %v41 = vld [vmem:[%s0 + $0x78] sm:$0xff]
  %v42 = vld [vmem:[%s0 + $0x80] sm:$0xff]
  %v43 = vld [vmem:[%s0 + $0x88] sm:$0xff]
  %v44 = vld [vmem:[%s0 + $0x90] sm:$0xff]
  %v45 = vld [vmem:[%s0 + $0x98] sm:$0xff]
  %v46 = vld [vmem:[%s0 + $0xa0] sm:$0xff]
  %v47 = vld [vmem:[%s0 + $0xa8] sm:$0xff]
  %v48 = vld [vmem:[%s0 + $0xb0] sm:$0xff]
  %v49 = vld [vmem:[%s0 + $0xb8] sm:$0xff]
  %v50 = vld [vmem:[%s0 + $0xc0] sm:$0xff]
  %v51 = vld [vmem:[%s0 + $0xc8] sm:$0xff]
  %v52 = vld [vmem:[%s0 + $0xd0] sm:$0xff]
  %v53 = vld [vmem:[%s0 + $0xd8] sm:$0xff]
  %v54 = vld [vmem:[%s0 + $0xe0] sm:$0xff]
  %v55 = vld [vmem:[%s0 + $0xe8] sm:$0xff]
  %v56 = vld [vmem:[%s0 + $0xf0] sm:$0xff]
  %v57 = vld [vmem:[%s0 + $0xf8] sm:$0xff]
  %v58 = vld [vmem:[%s1] sm:$0xf]
  %v59 = vld [vmem:[%s4] sm:$0x1]
  %v61 = vperm.slane %v59, 0
  %vm63 = vcmask 31744
  %v65 = vsel %vm63, %v26, 0
  %v68 = vsel %vm63, %v27, 0
  %v71 = vsel %vm63, %v28, 0
  %v74 = vsel %vm63, %v29, 0
  %v77 = vsel %vm63, %v30, 0
  %v80 = vsel %vm63, %v31, 0
  %v83 = vsel %vm63, %v32, 0
  %v86 = vsel %vm63, %v33, 0
  %v89 = vsel %vm63, %v34, 0
  %v92 = vsel %vm63, %v35, 0
  %v95 = vsel %vm63, %v36, 0
  %v98 = vsel %vm63, %v37, 0
  %v101 = vsel %vm63, %v38, 0
  %v104 = vsel %vm63, %v39, 0
  %v107 = vsel %vm63, %v40, 0
  %v110 = vsel %vm63, %v41, 0
  %v113 = vsel %vm63, %v42, 0
  %v116 = vsel %vm63, %v43, 0
  %v119 = vsel %vm63, %v44, 0
  %v122 = vsel %vm63, %v45, 0
  %v125 = vsel %vm63, %v46, 0
  %v128 = vsel %vm63, %v47, 0
  %v131 = vsel %vm63, %v48, 0
  %v134 = vsel %vm63, %v49, 0
  %v137 = vsel %vm63, %v50, 0
  %v140 = vsel %vm63, %v51, 0
  %v143 = vsel %vm63, %v52, 0
  %v146 = vsel %vm63, %v53, 0
  %v149 = vsel %vm63, %v54, 0
  %v152 = vsel %vm63, %v55, 0
  %v155 = vsel %vm63, %v56, 0
  %v158 = vsel %vm63, %v57, 0
  %vm160 = vcmask 1043456
  %v162 = vsel %vm160, %v58, 0
  %164 = vmatpush.msra.mxu0 0.0
  %165 = vmatpush.msra.mxu0 0.0
  %166 = vmatpush.msra.mxu0 0.0
  %167 = vmatpush.msra.mxu0 0.0
  %168 = vmatpush.msra.mxu0 0.0
  %169 = vmatpush.msra.mxu0 0.0
  %170 = vmatpush.msra.mxu0 0.0
  %171 = vmatpush.msra.mxu0 0.0
  %172 = vmatpush.msra.mxu0 0.0
  %173 = vmatpush.msra.mxu0 0.0
  %174 = vmatpush.msra.mxu0 0.0
  %175 = vmatpush.msra.mxu0 0.0
  %176 = vmatpush.msra.mxu0 0.0
  %177 = vmatpush.msra.mxu0 0.0
  %178 = vmatpush.msra.mxu0 0.0
  %179 = vmatpush.msra.mxu0 %v162
  %180 = vmatmul.f32.gmra.mxu0 %v65
  %v181 = vpop.f32.mrf.mxu0
  %v182 = vadd.f32 %v61, %v181
  %183 = vmatmul.f32.gmra.mxu0 %v68
  %v184 = vpop.f32.mrf.mxu0
  %v185 = vadd.f32 %v61, %v184
  %186 = vmatmul.f32.gmra.mxu0 %v71
  %v187 = vpop.f32.mrf.mxu0
  %v188 = vadd.f32 %v61, %v187
  %189 = vmatmul.f32.gmra.mxu0 %v74
  %v190 = vpop.f32.mrf.mxu0
  %v191 = vadd.f32 %v61, %v190
  %192 = vmatmul.f32.gmra.mxu0 %v77
  %v193 = vpop.f32.mrf.mxu0
  %v194 = vadd.f32 %v61, %v193
  %195 = vmatmul.f32.gmra.mxu0 %v80
  %v196 = vpop.f32.mrf.mxu0
  %v197 = vadd.f32 %v61, %v196
  %198 = vmatmul.f32.gmra.mxu0 %v83
  %v199 = vpop.f32.mrf.mxu0
  %v200 = vadd.f32 %v61, %v199
  %201 = vmatmul.f32.gmra.mxu0 %v86
  %v202 = vpop.f32.mrf.mxu0
  %v203 = vadd.f32 %v61, %v202
  %204 = vmatmul.f32.gmra.mxu0 %v89
  %v205 = vpop.f32.mrf.mxu0
  %v206 = vadd.f32 %v61, %v205
  %207 = vmatmul.f32.gmra.mxu0 %v92
  %v208 = vpop.f32.mrf.mxu0
  %v209 = vadd.f32 %v61, %v208
  %210 = vmatmul.f32.gmra.mxu0 %v95
  %v211 = vpop.f32.mrf.mxu0
  %v212 = vadd.f32 %v61, %v211
  %213 = vmatmul.f32.gmra.mxu0 %v98
  %v214 = vpop.f32.mrf.mxu0
  %v215 = vadd.f32 %v61, %v214
  %216 = vmatmul.f32.gmra.mxu0 %v101
  %v217 = vpop.f32.mrf.mxu0
  %v218 = vadd.f32 %v61, %v217
  %219 = vmatmul.f32.gmra.mxu0 %v104
  %v220 = vpop.f32.mrf.mxu0
  %v221 = vadd.f32 %v61, %v220
  %222 = vmatmul.f32.gmra.mxu0 %v107
  %v223 = vpop.f32.mrf.mxu0
  %v224 = vadd.f32 %v61, %v223
  %225 = vmatmul.f32.gmra.mxu0 %v110
  %v226 = vpop.f32.mrf.mxu0
  %v227 = vadd.f32 %v61, %v226
  %228 = vmatmul.f32.gmra.mxu0 %v113
  %v229 = vpop.f32.mrf.mxu0
  %v230 = vadd.f32 %v61, %v229
  %231 = vmatmul.f32.gmra.mxu0 %v116
  %v232 = vpop.f32.mrf.mxu0
  %v233 = vadd.f32 %v61, %v232
  %234 = vmatmul.f32.gmra.mxu0 %v119
  %v235 = vpop.f32.mrf.mxu0
  %v236 = vadd.f32 %v61, %v235
  %237 = vmatmul.f32.gmra.mxu0 %v122
  %v238 = vpop.f32.mrf.mxu0
  %v239 = vadd.f32 %v61, %v238
  %240 = vmatmul.f32.gmra.mxu0 %v125
  %v241 = vpop.f32.mrf.mxu0
  %v242 = vadd.f32 %v61, %v241
  %243 = vmatmul.f32.gmra.mxu0 %v128
  %v244 = vpop.f32.mrf.mxu0
  %v245 = vadd.f32 %v61, %v244
  %246 = vmatmul.f32.gmra.mxu0 %v131
  %v247 = vpop.f32.mrf.mxu0
  %v248 = vadd.f32 %v61, %v247
  %249 = vmatmul.f32.gmra.mxu0 %v134
  %v250 = vpop.f32.mrf.mxu0
  %v251 = vadd.f32 %v61, %v250
  %252 = vmatmul.f32.gmra.mxu0 %v137
  %v253 = vpop.f32.mrf.mxu0
  %v254 = vadd.f32 %v61, %v253
  %255 = vmatmul.f32.gmra.mxu0 %v140
  %v256 = vpop.f32.mrf.mxu0
  %v257 = vadd.f32 %v61, %v256
  %258 = vmatmul.f32.gmra.mxu0 %v143
  %v259 = vpop.f32.mrf.mxu0
  %v260 = vadd.f32 %v61, %v259
  %261 = vmatmul.f32.gmra.mxu0 %v146
  %v262 = vpop.f32.mrf.mxu0
  %v263 = vadd.f32 %v61, %v262
  %264 = vmatmul.f32.gmra.mxu0 %v149
  %v265 = vpop.f32.mrf.mxu0
  %v266 = vadd.f32 %v61, %v265
  %267 = vmatmul.f32.gmra.mxu0 %v152
  %v268 = vpop.f32.mrf.mxu0
  %v269 = vadd.f32 %v61, %v268
  %270 = vmatmul.f32.gmra.mxu0 %v155
  %v271 = vpop.f32.mrf.mxu0
  %v272 = vadd.f32 %v61, %v271
  %273 = vmatmul.f32.gmra.mxu0 %v158
  %v274 = vpop.f32.mrf.mxu0
  %v275 = vadd.f32 %v61, %v274
  %276 = vdwg.mxu0
  %v277 = vmax.f32 %v182, 0.0
  %v278 = vmax.f32 %v185, 0.0
  %v279 = vmax.f32 %v188, 0.0
  %v280 = vmax.f32 %v191, 0.0
  %v281 = vmax.f32 %v194, 0.0
  %v282 = vmax.f32 %v197, 0.0
  %v283 = vmax.f32 %v200, 0.0
  %v284 = vmax.f32 %v203, 0.0
  %v285 = vmax.f32 %v206, 0.0
  %v286 = vmax.f32 %v209, 0.0
  %v287 = vmax.f32 %v212, 0.0
  %v288 = vmax.f32 %v215, 0.0
  %v289 = vmax.f32 %v218, 0.0
  %v290 = vmax.f32 %v221, 0.0
  %v291 = vmax.f32 %v224, 0.0
  %v292 = vmax.f32 %v227, 0.0
  %v293 = vmax.f32 %v230, 0.0
  %v294 = vmax.f32 %v233, 0.0
  %v295 = vmax.f32 %v236, 0.0
  %v296 = vmax.f32 %v239, 0.0
  %v297 = vmax.f32 %v242, 0.0
  %v298 = vmax.f32 %v245, 0.0
  %v299 = vmax.f32 %v248, 0.0
  %v300 = vmax.f32 %v251, 0.0
  %v301 = vmax.f32 %v254, 0.0
  %v302 = vmax.f32 %v257, 0.0
  %v303 = vmax.f32 %v260, 0.0
  %v304 = vmax.f32 %v263, 0.0
  %v305 = vmax.f32 %v266, 0.0
  %v306 = vmax.f32 %v269, 0.0
  %v307 = vmax.f32 %v272, 0.0
  %v308 = vmax.f32 %v275, 0.0
  %v309 = vpack.c.bf16 %v278, %v277
  %v310 = vpack.c.bf16 %v280, %v279
  %v311 = vpack.c.bf16 %v282, %v281
  %v312 = vpack.c.bf16 %v284, %v283
  %v313 = vpack.c.bf16 %v286, %v285
  %v314 = vpack.c.bf16 %v288, %v287
  %v315 = vpack.c.bf16 %v290, %v289
  %v316 = vpack.c.bf16 %v292, %v291
  %v317 = vpack.c.bf16 %v294, %v293
  %v318 = vpack.c.bf16 %v296, %v295
  %v319 = vpack.c.bf16 %v298, %v297
  %v320 = vpack.c.bf16 %v300, %v299
  %v321 = vpack.c.bf16 %v302, %v301
  %v322 = vpack.c.bf16 %v304, %v303
  %v323 = vpack.c.bf16 %v306, %v305
  %v324 = vpack.c.bf16 %v308, %v307
  %v325 = vld [vmem:[%s2] sm:$0xf]
  %v326 = vld [vmem:[%s2 + $0x4] sm:$0xf]
  %v327 = vld [vmem:[%s2 + $0x8] sm:$0xf]
  %v328 = vld [vmem:[%s2 + $0xc] sm:$0xf]
  %v329 = vld [vmem:[%s2 + $0x10] sm:$0xf]
  %v330 = vld [vmem:[%s2 + $0x14] sm:$0xf]
  %v331 = vld [vmem:[%s2 + $0x18] sm:$0xf]
  %v332 = vld [vmem:[%s2 + $0x1c] sm:$0xf]
  %v333 = vld [vmem:[%s2 + $0x20] sm:$0xf]
  %v334 = vld [vmem:[%s2 + $0x24] sm:$0xf]
  %v335 = vld [vmem:[%s2 + $0x28] sm:$0xf]
  %v336 = vld [vmem:[%s2 + $0x2c] sm:$0xf]
  %v337 = vld [vmem:[%s2 + $0x30] sm:$0xf]
  %v338 = vld [vmem:[%s2 + $0x34] sm:$0xf]
  %v339 = vld [vmem:[%s2 + $0x38] sm:$0xf]
  %v340 = vld [vmem:[%s2 + $0x3c] sm:$0xf]
  %v341 = vld [vmem:[%s5] sm:$0x1]
  %v343 = vperm.slane %v341, 0
  %v361 = vunpack.c.l.b16 %v325
  %v362 = vunpack.c.l.b16 %v326
  %v363 = vunpack.c.l.b16 %v327
  %v364 = vunpack.c.l.b16 %v328
  %v365 = vunpack.c.l.b16 %v329
  %v366 = vunpack.c.l.b16 %v330
  %v367 = vunpack.c.l.b16 %v331
  %v368 = vunpack.c.l.b16 %v332
  %v369 = vunpack.c.l.b16 %v333
  %v370 = vunpack.c.l.b16 %v334
  %v371 = vunpack.c.l.b16 %v335
  %v372 = vunpack.c.l.b16 %v336
  %v373 = vunpack.c.l.b16 %v337
  %v374 = vunpack.c.l.b16 %v338
  %v375 = vunpack.c.l.b16 %v339
  %v376 = vunpack.c.l.b16 %v340
  %v377 = vpack.c.b16 %v362, %v361
  %v378 = vpack.c.b16 %v364, %v363
  %v379 = vpack.c.b16 %v366, %v365
  %v380 = vpack.c.b16 %v368, %v367
  %v381 = vpack.c.b16 %v370, %v369
  %v382 = vpack.c.b16 %v372, %v371
  %v383 = vpack.c.b16 %v374, %v373
  %v384 = vpack.c.b16 %v376, %v375
  %393 = vmatpush.bf16.msra.mxu0 %v384
  %394 = vmatpush.bf16.msra.mxu0 %v383
  %395 = vmatpush.bf16.msra.mxu0 %v382
  %396 = vmatpush.bf16.msra.mxu0 %v381
  %397 = vmatpush.bf16.msra.mxu0 %v380
  %398 = vmatpush.bf16.msra.mxu0 %v379
  %399 = vmatpush.bf16.msra.mxu0 %v378
  %400 = vmatpush.bf16.msra.mxu0 %v377
  %401 = vmatmul.bf16.gmra.mxu0 %v309
  %v402 = vpop.f32.mrf.mxu0
  %v403 = vadd.f32 %v343, %v402
  %v404 = vpop.f32.mrf.mxu0
  %v405 = vadd.f32 %v343, %v404
  %406 = vmatmul.bf16.gmra.mxu0 %v310
  %v407 = vpop.f32.mrf.mxu0
  %v408 = vadd.f32 %v343, %v407
  %v409 = vpop.f32.mrf.mxu0
  %v410 = vadd.f32 %v343, %v409
  %411 = vmatmul.bf16.gmra.mxu0 %v311
  %v412 = vpop.f32.mrf.mxu0
  %v413 = vadd.f32 %v343, %v412
  %v414 = vpop.f32.mrf.mxu0
  %v415 = vadd.f32 %v343, %v414
  %416 = vmatmul.bf16.gmra.mxu0 %v312
  %v417 = vpop.f32.mrf.mxu0
  %v418 = vadd.f32 %v343, %v417
  %v419 = vpop.f32.mrf.mxu0
  %v420 = vadd.f32 %v343, %v419
  %421 = vmatmul.bf16.gmra.mxu0 %v313
  %v422 = vpop.f32.mrf.mxu0
  %v423 = vadd.f32 %v343, %v422
  %v424 = vpop.f32.mrf.mxu0
  %v425 = vadd.f32 %v343, %v424
  %426 = vmatmul.bf16.gmra.mxu0 %v314
  %v427 = vpop.f32.mrf.mxu0
  %v428 = vadd.f32 %v343, %v427
  %v429 = vpop.f32.mrf.mxu0
  %v430 = vadd.f32 %v343, %v429
  %431 = vmatmul.bf16.gmra.mxu0 %v315
  %v432 = vpop.f32.mrf.mxu0
  %v433 = vadd.f32 %v343, %v432
  %v434 = vpop.f32.mrf.mxu0
  %v435 = vadd.f32 %v343, %v434
  %436 = vmatmul.bf16.gmra.mxu0 %v316
  %v437 = vpop.f32.mrf.mxu0
  %v438 = vadd.f32 %v343, %v437
  %v439 = vpop.f32.mrf.mxu0
  %v440 = vadd.f32 %v343, %v439
  %441 = vmatmul.bf16.gmra.mxu0 %v317
  %v442 = vpop.f32.mrf.mxu0
  %v443 = vadd.f32 %v343, %v442
  %v444 = vpop.f32.mrf.mxu0
  %v445 = vadd.f32 %v343, %v444
  %446 = vmatmul.bf16.gmra.mxu0 %v318
  %v447 = vpop.f32.mrf.mxu0
  %v448 = vadd.f32 %v343, %v447
  %v449 = vpop.f32.mrf.mxu0
  %v450 = vadd.f32 %v343, %v449
  %451 = vmatmul.bf16.gmra.mxu0 %v319
  %v452 = vpop.f32.mrf.mxu0
  %v453 = vadd.f32 %v343, %v452
  %v454 = vpop.f32.mrf.mxu0
  %v455 = vadd.f32 %v343, %v454
  %456 = vmatmul.bf16.gmra.mxu0 %v320
  %v457 = vpop.f32.mrf.mxu0
  %v458 = vadd.f32 %v343, %v457
  %v459 = vpop.f32.mrf.mxu0
  %v460 = vadd.f32 %v343, %v459
  %461 = vmatmul.bf16.gmra.mxu0 %v321
  %v462 = vpop.f32.mrf.mxu0
  %v463 = vadd.f32 %v343, %v462
  %v464 = vpop.f32.mrf.mxu0
  %v465 = vadd.f32 %v343, %v464
  %466 = vmatmul.bf16.gmra.mxu0 %v322
  %v467 = vpop.f32.mrf.mxu0
  %v468 = vadd.f32 %v343, %v467
  %v469 = vpop.f32.mrf.mxu0
  %v470 = vadd.f32 %v343, %v469
  %471 = vmatmul.bf16.gmra.mxu0 %v323
  %v472 = vpop.f32.mrf.mxu0
  %v473 = vadd.f32 %v343, %v472
  %v474 = vpop.f32.mrf.mxu0
  %v475 = vadd.f32 %v343, %v474
  %476 = vmatmul.bf16.gmra.mxu0 %v324
  %v477 = vpop.f32.mrf.mxu0
  %v478 = vadd.f32 %v343, %v477
  %v479 = vpop.f32.mrf.mxu0
  %v480 = vadd.f32 %v343, %v479
  %481 = vdwg.mxu0
  %v482 = vmax.f32 %v403, 0.0
  %v483 = vmax.f32 %v405, 0.0
  %v484 = vmax.f32 %v408, 0.0
  %v485 = vmax.f32 %v410, 0.0
  %v486 = vmax.f32 %v413, 0.0
  %v487 = vmax.f32 %v415, 0.0
  %v488 = vmax.f32 %v418, 0.0
  %v489 = vmax.f32 %v420, 0.0
  %v490 = vmax.f32 %v423, 0.0
  %v491 = vmax.f32 %v425, 0.0
  %v492 = vmax.f32 %v428, 0.0
  %v493 = vmax.f32 %v430, 0.0
  %v494 = vmax.f32 %v433, 0.0
  %v495 = vmax.f32 %v435, 0.0
  %v496 = vmax.f32 %v438, 0.0
  %v497 = vmax.f32 %v440, 0.0
  %v498 = vmax.f32 %v443, 0.0
  %v499 = vmax.f32 %v445, 0.0
  %v500 = vmax.f32 %v448, 0.0
  %v501 = vmax.f32 %v450, 0.0
  %v502 = vmax.f32 %v453, 0.0
  %v503 = vmax.f32 %v455, 0.0
  %v504 = vmax.f32 %v458, 0.0
  %v505 = vmax.f32 %v460, 0.0
  %v506 = vmax.f32 %v463, 0.0
  %v507 = vmax.f32 %v465, 0.0
  %v508 = vmax.f32 %v468, 0.0
  %v509 = vmax.f32 %v470, 0.0
  %v510 = vmax.f32 %v473, 0.0
  %v511 = vmax.f32 %v475, 0.0
  %v512 = vmax.f32 %v478, 0.0
  %v513 = vmax.f32 %v480, 0.0
  %v514 = vpack.c.bf16 %v483, %v482
  %v515 = vpack.c.bf16 %v485, %v484
  %v516 = vpack.c.bf16 %v487, %v486
  %v517 = vpack.c.bf16 %v489, %v488
  %v518 = vpack.c.bf16 %v491, %v490
  %v519 = vpack.c.bf16 %v493, %v492
  %v520 = vpack.c.bf16 %v495, %v494
  %v521 = vpack.c.bf16 %v497, %v496
  %v522 = vpack.c.bf16 %v499, %v498
  %v523 = vpack.c.bf16 %v501, %v500
  %v524 = vpack.c.bf16 %v503, %v502
  %v525 = vpack.c.bf16 %v505, %v504
  %v526 = vpack.c.bf16 %v507, %v506
  %v527 = vpack.c.bf16 %v509, %v508
  %v528 = vpack.c.bf16 %v511, %v510
  %v529 = vpack.c.bf16 %v513, %v512
  %v530 = vld [vmem:[%s3] sm:$0xf]
  %v531 = vld [vmem:[%s3 + $0x4] sm:$0xf]
  %v532 = vld [vmem:[%s3 + $0x8] sm:$0xf]
  %v533 = vld [vmem:[%s3 + $0xc] sm:$0xf]
  %v534 = vld [vmem:[%s3 + $0x10] sm:$0xf]
  %v535 = vld [vmem:[%s3 + $0x14] sm:$0xf]
  %v536 = vld [vmem:[%s3 + $0x18] sm:$0xf]
  %v537 = vld [vmem:[%s3 + $0x1c] sm:$0xf]
  %v538 = vld [vmem:[%s3 + $0x20] sm:$0xf]
  %v539 = vld [vmem:[%s3 + $0x24] sm:$0xf]
  %v540 = vld [vmem:[%s3 + $0x28] sm:$0xf]
  %v541 = vld [vmem:[%s3 + $0x2c] sm:$0xf]
  %v542 = vld [vmem:[%s3 + $0x30] sm:$0xf]
  %v543 = vld [vmem:[%s3 + $0x34] sm:$0xf]
  %v544 = vld [vmem:[%s3 + $0x38] sm:$0xf]
  %v545 = vld [vmem:[%s3 + $0x3c] sm:$0xf]
  %v546 = vld [vmem:[%s6] sm:$0x1]
  %v548 = vperm.slane %v546, 0
  %v566 = vunpack.c.l.b16 %v530
  %v567 = vunpack.c.l.b16 %v531
  %v568 = vunpack.c.l.b16 %v532
  %v569 = vunpack.c.l.b16 %v533
  %v570 = vunpack.c.l.b16 %v534
  %v571 = vunpack.c.l.b16 %v535
  %v572 = vunpack.c.l.b16 %v536
  %v573 = vunpack.c.l.b16 %v537
  %v574 = vunpack.c.l.b16 %v538
  %v575 = vunpack.c.l.b16 %v539
  %v576 = vunpack.c.l.b16 %v540
  %v577 = vunpack.c.l.b16 %v541
  %v578 = vunpack.c.l.b16 %v542
  %v579 = vunpack.c.l.b16 %v543
  %v580 = vunpack.c.l.b16 %v544
  %v581 = vunpack.c.l.b16 %v545
  %v582 = vpack.c.b16 %v567, %v566
  %v583 = vpack.c.b16 %v569, %v568
  %v584 = vpack.c.b16 %v571, %v570
  %v585 = vpack.c.b16 %v573, %v572
  %v586 = vpack.c.b16 %v575, %v574
  %v587 = vpack.c.b16 %v577, %v576
  %v588 = vpack.c.b16 %v579, %v578
  %v589 = vpack.c.b16 %v581, %v580
  %598 = vmatpush.bf16.msra.mxu0 %v589
  %599 = vmatpush.bf16.msra.mxu0 %v588
  %600 = vmatpush.bf16.msra.mxu0 %v587
  %601 = vmatpush.bf16.msra.mxu0 %v586
  %602 = vmatpush.bf16.msra.mxu0 %v585
  %603 = vmatpush.bf16.msra.mxu0 %v584
  %604 = vmatpush.bf16.msra.mxu0 %v583
  %605 = vmatpush.bf16.msra.mxu0 %v582
  %606 = vmatmul.bf16.gmra.mxu0 %v514
  %v607 = vpop.f32.mrf.mxu0
  %v608 = vadd.f32 %v548, %v607
  %v609 = vpop.f32.mrf.mxu0
  %v610 = vadd.f32 %v548, %v609
  %611 = vmatmul.bf16.gmra.mxu0 %v515
  %v612 = vpop.f32.mrf.mxu0
  %v613 = vadd.f32 %v548, %v612
  %v614 = vpop.f32.mrf.mxu0
  %v615 = vadd.f32 %v548, %v614
  %616 = vmatmul.bf16.gmra.mxu0 %v516
  %v617 = vpop.f32.mrf.mxu0
  %v618 = vadd.f32 %v548, %v617
  %v619 = vpop.f32.mrf.mxu0
  %v620 = vadd.f32 %v548, %v619
  %621 = vmatmul.bf16.gmra.mxu0 %v517
  %v622 = vpop.f32.mrf.mxu0
  %v623 = vadd.f32 %v548, %v622
  %v624 = vpop.f32.mrf.mxu0
  %v625 = vadd.f32 %v548, %v624
  %626 = vmatmul.bf16.gmra.mxu0 %v518
  %v627 = vpop.f32.mrf.mxu0
  %v628 = vadd.f32 %v548, %v627
  %v629 = vpop.f32.mrf.mxu0
  %v630 = vadd.f32 %v548, %v629
  %631 = vmatmul.bf16.gmra.mxu0 %v519
  %v632 = vpop.f32.mrf.mxu0
  %v633 = vadd.f32 %v548, %v632
  %v634 = vpop.f32.mrf.mxu0
  %v635 = vadd.f32 %v548, %v634
  %636 = vmatmul.bf16.gmra.mxu0 %v520
  %v637 = vpop.f32.mrf.mxu0
  %v638 = vadd.f32 %v548, %v637
  %v639 = vpop.f32.mrf.mxu0
  %v640 = vadd.f32 %v548, %v639
  %641 = vmatmul.bf16.gmra.mxu0 %v521
  %v642 = vpop.f32.mrf.mxu0
  %v643 = vadd.f32 %v548, %v642
  %v644 = vpop.f32.mrf.mxu0
  %v645 = vadd.f32 %v548, %v644
  %646 = vmatmul.bf16.gmra.mxu0 %v522
  %v647 = vpop.f32.mrf.mxu0
  %v648 = vadd.f32 %v548, %v647
  %v649 = vpop.f32.mrf.mxu0
  %v650 = vadd.f32 %v548, %v649
  %651 = vmatmul.bf16.gmra.mxu0 %v523
  %v652 = vpop.f32.mrf.mxu0
  %v653 = vadd.f32 %v548, %v652
  %v654 = vpop.f32.mrf.mxu0
  %v655 = vadd.f32 %v548, %v654
  %656 = vmatmul.bf16.gmra.mxu0 %v524
  %v657 = vpop.f32.mrf.mxu0
  %v658 = vadd.f32 %v548, %v657
  %v659 = vpop.f32.mrf.mxu0
  %v660 = vadd.f32 %v548, %v659
  %661 = vmatmul.bf16.gmra.mxu0 %v525
  %v662 = vpop.f32.mrf.mxu0
  %v663 = vadd.f32 %v548, %v662
  %v664 = vpop.f32.mrf.mxu0
  %v665 = vadd.f32 %v548, %v664
  %666 = vmatmul.bf16.gmra.mxu0 %v526
  %v667 = vpop.f32.mrf.mxu0
  %v668 = vadd.f32 %v548, %v667
  %v669 = vpop.f32.mrf.mxu0
  %v670 = vadd.f32 %v548, %v669
  %671 = vmatmul.bf16.gmra.mxu0 %v527
  %v672 = vpop.f32.mrf.mxu0
  %v673 = vadd.f32 %v548, %v672
  %v674 = vpop.f32.mrf.mxu0
  %v675 = vadd.f32 %v548, %v674
  %676 = vmatmul.bf16.gmra.mxu0 %v528
  %v677 = vpop.f32.mrf.mxu0
  %v678 = vadd.f32 %v548, %v677
  %v679 = vpop.f32.mrf.mxu0
  %v680 = vadd.f32 %v548, %v679
  %681 = vmatmul.bf16.gmra.mxu0 %v529
  %v682 = vpop.f32.mrf.mxu0
  %v683 = vadd.f32 %v548, %v682
  %v684 = vpop.f32.mrf.mxu0
  %v685 = vadd.f32 %v548, %v684
  %686 = vdwg.mxu0
  %vm687 = vcmask 15360
  %688 = vst.msk [vmem:[%s7] sm:$0xff] %vm687, %v608
  %689 = vst.msk [vmem:[%s7 + $0x8] sm:$0xff] %vm687, %v610
  %690 = vst.msk [vmem:[%s7 + $0x10] sm:$0xff] %vm687, %v613
  %691 = vst.msk [vmem:[%s7 + $0x18] sm:$0xff] %vm687, %v615
  %692 = vst.msk [vmem:[%s7 + $0x20] sm:$0xff] %vm687, %v618
  %693 = vst.msk [vmem:[%s7 + $0x28] sm:$0xff] %vm687, %v620
  %694 = vst.msk [vmem:[%s7 + $0x30] sm:$0xff] %vm687, %v623
  %695 = vst.msk [vmem:[%s7 + $0x38] sm:$0xff] %vm687, %v625
  %696 = vst.msk [vmem:[%s7 + $0x40] sm:$0xff] %vm687, %v628
  %697 = vst.msk [vmem:[%s7 + $0x48] sm:$0xff] %vm687, %v630
  %698 = vst.msk [vmem:[%s7 + $0x50] sm:$0xff] %vm687, %v633
  %699 = vst.msk [vmem:[%s7 + $0x58] sm:$0xff] %vm687, %v635
  %700 = vst.msk [vmem:[%s7 + $0x60] sm:$0xff] %vm687, %v638
  %701 = vst.msk [vmem:[%s7 + $0x68] sm:$0xff] %vm687, %v640
  %702 = vst.msk [vmem:[%s7 + $0x70] sm:$0xff] %vm687, %v643
  %703 = vst.msk [vmem:[%s7 + $0x78] sm:$0xff] %vm687, %v645
  %704 = vst.msk [vmem:[%s7 + $0x80] sm:$0xff] %vm687, %v648
  %705 = vst.msk [vmem:[%s7 + $0x88] sm:$0xff] %vm687, %v650
  %706 = vst.msk [vmem:[%s7 + $0x90] sm:$0xff] %vm687, %v653
  %707 = vst.msk [vmem:[%s7 + $0x98] sm:$0xff] %vm687, %v655
  %708 = vst.msk [vmem:[%s7 + $0xa0] sm:$0xff] %vm687, %v658
  %709 = vst.msk [vmem:[%s7 + $0xa8] sm:$0xff] %vm687, %v660
  %710 = vst.msk [vmem:[%s7 + $0xb0] sm:$0xff] %vm687, %v663
  %711 = vst.msk [vmem:[%s7 + $0xb8] sm:$0xff] %vm687, %v665
  %712 = vst.msk [vmem:[%s7 + $0xc0] sm:$0xff] %vm687, %v668
  %713 = vst.msk [vmem:[%s7 + $0xc8] sm:$0xff] %vm687, %v670
  %714 = vst.msk [vmem:[%s7 + $0xd0] sm:$0xff] %vm687, %v673
  %715 = vst.msk [vmem:[%s7 + $0xd8] sm:$0xff] %vm687, %v675
  %716 = vst.msk [vmem:[%s7 + $0xe0] sm:$0xff] %vm687, %v678
  %717 = vst.msk [vmem:[%s7 + $0xe8] sm:$0xff] %vm687, %v680
  %718 = vst.msk [vmem:[%s7 + $0xf0] sm:$0xff] %vm687, %v683
  %719 = vst.msk [vmem:[%s7 + $0xf8] sm:$0xff] %vm687, %v685
  // Predicated region
  $region30: #{_lambda_.1} parent=0 // pred_check
    _
  $region31: #{_lambda_.1} parent=0 // pred_check_branch
    %721 = sbr.rel (0) target = $region33
  $region32: #{_lambda_.1} parent=0 // pred_region
    _
  $region33: #{_lambda_.1} parent=0 // pred_fallthru
    _
  // Predicated region
  $region34: #{_lambda_.1} parent=0 // pred_check
    _
  $region35: #{_lambda_.1} parent=0 // pred_check_branch
    %723 = sbr.rel (0) target = $region37
  $region36: #{_lambda_.1} parent=0 // pred_region
    _
  $region37: #{_lambda_.1} parent=0 // pred_fallthru
    _

</llo_original>
